<compile_context>
chip_gen: v7x
topology: tpu7x:2x2x1
jax: 0.10.0
libtpu: 0.0.40
codegen_flags: <defaults>
</compile_context>

<pallas_src>
import jax
import jax.numpy as jnp
from jax.experimental import pallas as pl
from jax.experimental.pallas import tpu as pltpu

Z_DIM = 25
H_DIM = 100
H_PAD = 128           # hidden dim padded to a full lane width
X_DIM = 16 * 16       # synthetic stand-in for the dataset-derived X_dim


def _cdiv(a, b):
    return (a + b - 1) // b


def _round_up(n, m):
    return ((n + m - 1) // m) * m


def gen_mlp_kernel(x_ref, w1_ref, b1_ref, w23_ref, b23_ref, o_ref):
    """Fused 2-matmul MLP (layer 2 folded into layer 3) for one batch tile."""
    # Linear(Z -> Hpad) + ReLU.  bf16 x bf16 -> f32 accumulate on the MXU.
    h1 = jnp.dot(x_ref[...], w1_ref[...],
                 preferred_element_type=jnp.float32) + b1_ref[...]
    h1 = jnp.maximum(h1, 0.0)

    # Folded Linear(Hpad -> X): (w2 @ w3) with (b2 @ w3 + b3) bias.
    out = jnp.dot(h1.astype(jnp.bfloat16), w23_ref[...],
                  preferred_element_type=jnp.float32) + b23_ref[...]
    o_ref[...] = out.astype(o_ref.dtype)


def prepare_params(params):
    """One-time fold / pad / cast of the raw Linear params for the kernel.

    Returns (w1p_bf16[Z,128], b1p_f32[1,128], w23p_bf16[128,X], b23_f32[1,X]).
    """
    w1, b1, w2, b2, w3, b3 = params
    hp = H_PAD - H_DIM

    # Fold layer 2 into layer 3 (LeakyReLU(negative_slope=1.0) is identity).
    w23 = w2 @ w3                     # (H_DIM, X_DIM), f32
    b23 = b2 @ w3 + b3                # (1, X_DIM),     f32

    # Zero-pad hidden dim 100 -> 128 (inert through ReLU and the matmuls).
    w1p = jnp.pad(w1, ((0, 0), (0, hp))).astype(jnp.bfloat16)
    b1p = jnp.pad(b1, ((0, 0), (0, hp))).astype(jnp.float32)
    w23p = jnp.pad(w23, ((0, hp), (0, 0))).astype(jnp.bfloat16)
    b23 = b23.astype(jnp.float32)
    return (w1p, b1p, w23p, b23)


def gen_forward(x, prepared_params, *, batch_tile=2048):
    """Run the Gen MLP via a single fused Pallas kernel, tiled over the batch."""
    w1p, b1p, w23p, b23 = prepared_params
    B = x.shape[0]

    # --- batch tile selection: bounded padding waste, >=2 steps for v7x -----
    ntiles = _cdiv(B, batch_tile)
    if B >= 256 and ntiles < 2:
        ntiles = 2                    # let the parallel axis use both v7x TCs
    bt = _round_up(_cdiv(B, ntiles), 8)
    grid_n = _cdiv(B, bt)
    Bp = grid_n * bt

    xb = x.astype(jnp.bfloat16)
    if Bp != B:
        xb = jnp.pad(xb, ((0, Bp - B), (0, 0)))

    # Grid-invariant operands: constant index_map -> fetched once, not re-DMA'd.
    full = lambda shape: pl.BlockSpec(shape, lambda i: (0, 0))

    out = pl.pallas_call(
        gen_mlp_kernel,
        out_shape=jax.ShapeDtypeStruct((Bp, X_DIM), jnp.float32),
        grid_spec=pl.GridSpec(
            grid=(grid_n,),
            in_specs=[
                pl.BlockSpec((bt, Z_DIM), lambda i: (i, 0)),  # x tile (streams)
                full((Z_DIM, H_PAD)),    # w1  (bf16)
                full((1, H_PAD)),        # b1  (f32)
                full((H_PAD, X_DIM)),    # w23 (bf16)
                full((1, X_DIM)),        # b23 (f32)
            ],
            out_specs=pl.BlockSpec((bt, X_DIM), lambda i: (i, 0)),
        ),
        compiler_params=pltpu.CompilerParams(
            dimension_semantics=("parallel",),
        ),
    )(xb, w1p, b1p, w23p, b23)

    return out[:B] if Bp != B else out


def init_params(key):
    """Deterministic init mimicking PyTorch Linear's U(-1/sqrt(fan_in), 1/sqrt(fan_in))."""
    ks = jax.random.split(key, 6)

    def linear(kw, kb, fan_in, fan_out):
        bound = 1.0 / jnp.sqrt(jnp.float32(fan_in))
        w = jax.random.uniform(kw, (fan_in, fan_out), jnp.float32, -bound, bound)
        b = jax.random.uniform(kb, (1, fan_out), jnp.float32, -bound, bound)
        return w, b

    w1, b1 = linear(ks[0], ks[1], Z_DIM, H_DIM)
    w2, b2 = linear(ks[2], ks[3], H_DIM, H_DIM)
    w3, b3 = linear(ks[4], ks[5], H_DIM, X_DIM)
    return (w1, b1, w2, b2, w3, b3)


def gen_forward_ref_f32(x, params):
    """Pure-JAX f32 reference of Gen.forward (unfolded, full precision)."""
    w1, b1, w2, b2, w3, b3 = params
    h1 = jnp.maximum(x @ w1 + b1, 0.0)
    h2 = h1 @ w2 + b2                 # LeakyReLU(slope=1.0) == identity
    return h2 @ w3 + b3


def gen_forward_ref_folded_bf16(x, prepared_params):
    """Pure-JAX reference matching the kernel's folded bf16 numerics."""
    w1p, b1p, w23p, b23 = prepared_params
    h1 = jnp.maximum(
        jnp.dot(x.astype(jnp.bfloat16), w1p, preferred_element_type=jnp.float32)
        + b1p, 0.0)
    return jnp.dot(h1.astype(jnp.bfloat16), w23p,
                   preferred_element_type=jnp.float32) + b23


if __name__ == "__main__":
    # TODO(synk): X_dim in the original script comes from a dataset file on disk;
    # a synthetic 16x16 (=256) flattened map is used here instead.
    key = jax.random.PRNGKey(0)
    k_x, k_p = jax.random.split(key)

    B = 64  # matches the original script's batch_size; tile clamps to it
    x = jax.random.normal(k_x, (B, Z_DIM), jnp.float32)

    params = init_params(k_p)
    prepared = prepare_params(params)     # fold/pad/cast once, not per call

    out = gen_forward(x, prepared)
    out = jax.block_until_ready(out)
    assert out.shape == (B, X_DIM)

    # Tight check against a pure-JAX path with identical folded/bf16 numerics.
    ref_bf16 = gen_forward_ref_folded_bf16(x, prepared)
    assert jnp.allclose(out, ref_bf16, atol=2e-3, rtol=2e-3), \
        "mismatch vs folded-bf16 reference"

    # Loose check against the full-precision unfolded reference (bf16 drift).
    ref_f32 = gen_forward_ref_f32(x, params)
    assert jnp.allclose(out, ref_f32, atol=5e-2, rtol=5e-2), \
        "mismatch vs f32 reference"

    print("KERNEL_OK")
</pallas_src>

<mosaic_0001>
module attributes {stable_mosaic.version = 11 : i64} {
  func.func @gen_mlp_kernel(%arg0: i32, %arg1: memref<64x25xbf16, #tpu.memory_space<vmem>>, %arg2: memref<25x128xbf16, #tpu.memory_space<vmem>>, %arg3: memref<1x128xf32, #tpu.memory_space<vmem>>, %arg4: memref<128x256xbf16, #tpu.memory_space<vmem>>, %arg5: memref<1x256xf32, #tpu.memory_space<vmem>>, %arg6: memref<64x256xf32, #tpu.memory_space<vmem>>) attributes {dimension_semantics = [#tpu.dimension_semantics<parallel>], iteration_bounds = array<i64: 1>, scalar_prefetch = 0 : i64, scratch_operands = 0 : i64, tpu.core_type = #tpu.core_type<tc>, window_params = [{transform_indices = @transform_0, window_bounds = array<i64: 64, 25>}, {pipeline_mode = #tpu.pipeline_mode<synchronous>, transform_indices = @transform_1, window_bounds = array<i64: 25, 128>}, {pipeline_mode = #tpu.pipeline_mode<synchronous>, transform_indices = @transform_2, window_bounds = array<i64: 1, 128>}, {pipeline_mode = #tpu.pipeline_mode<synchronous>, transform_indices = @transform_3, window_bounds = array<i64: 128, 256>}, {pipeline_mode = #tpu.pipeline_mode<synchronous>, transform_indices = @transform_4, window_bounds = array<i64: 1, 256>}, {transform_indices = @transform_5, window_bounds = array<i64: 64, 256>}]} {
    %c0 = arith.constant 0 : index
    %c0_0 = arith.constant 0 : index
    %0 = vector.load %arg1[%c0, %c0_0] : memref<64x25xbf16, #tpu.memory_space<vmem>>, vector<64x25xbf16>
    %c0_1 = arith.constant 0 : index
    %c0_2 = arith.constant 0 : index
    %1 = vector.load %arg2[%c0_1, %c0_2] : memref<25x128xbf16, #tpu.memory_space<vmem>>, vector<25x128xbf16>
    %cst = arith.constant dense<0.000000e+00> : vector<64x128xf32>
    %2 = tpu.matmul %0, %1, %cst {dimension_numbers = #tpu.dot_dimension_numbers<[1], [0], [0], [1], [0, 0, 1, 1], [], []>} : vector<64x25xbf16>, vector<25x128xbf16>, vector<64x128xf32> -> vector<64x128xf32>
    %c0_3 = arith.constant 0 : index
    %c0_4 = arith.constant 0 : index
    %3 = vector.load %arg3[%c0_3, %c0_4] : memref<1x128xf32, #tpu.memory_space<vmem>>, vector<1x128xf32>
    %4 = vector.broadcast %3 : vector<1x128xf32> to vector<64x128xf32>
    %5 = arith.addf %2, %4 : vector<64x128xf32>
    %cst_5 = arith.constant 0.000000e+00 : f32
    %6 = vector.broadcast %cst_5 : f32 to vector<64x128xf32>
    %7 = arith.maximumf %5, %6 : vector<64x128xf32>
    %8 = arith.truncf %7 : vector<64x128xf32> to vector<64x128xbf16>
    %c0_6 = arith.constant 0 : index
    %c0_7 = arith.constant 0 : index
    %9 = vector.load %arg4[%c0_6, %c0_7] : memref<128x256xbf16, #tpu.memory_space<vmem>>, vector<128x256xbf16>
    %cst_8 = arith.constant dense<0.000000e+00> : vector<64x256xf32>
    %10 = tpu.matmul %8, %9, %cst_8 {dimension_numbers = #tpu.dot_dimension_numbers<[1], [0], [0], [1], [0, 0, 1, 1], [], []>} : vector<64x128xbf16>, vector<128x256xbf16>, vector<64x256xf32> -> vector<64x256xf32>
    %c0_9 = arith.constant 0 : index
    %c0_10 = arith.constant 0 : index
    %11 = vector.load %arg5[%c0_9, %c0_10] : memref<1x256xf32, #tpu.memory_space<vmem>>, vector<1x256xf32>
    %12 = vector.broadcast %11 : vector<1x256xf32> to vector<64x256xf32>
    %13 = arith.addf %10, %12 : vector<64x256xf32>
    %c0_11 = arith.constant 0 : index
    %c0_12 = arith.constant 0 : index
    %14 = vector.load %arg6[%c0_11, %c0_12] : memref<64x256xf32, #tpu.memory_space<vmem>>, vector<64x256xf32>
    tpu.vector_store %arg6[%c0_11, %c0_12], %13 {strides = array<i32>} : memref<64x256xf32, #tpu.memory_space<vmem>>, vector<64x256xf32>,
    return
  }
  func.func @transform_0(%arg0: i32) -> (i32, i32) {
    %c0_i32 = arith.constant 0 : i32
    %c0_i32_0 = arith.constant 0 : i32
    return %arg0, %c0_i32 : i32, i32
  }
  func.func @transform_1(%arg0: i32) -> (i32, i32) {
    %c0_i32 = arith.constant 0 : i32
    %c0_i32_0 = arith.constant 0 : i32
    %c0_i32_1 = arith.constant 0 : i32
    return %c0_i32, %c0_i32_0 : i32, i32
  }
  func.func @transform_2(%arg0: i32) -> (i32, i32) {
    %c0_i32 = arith.constant 0 : i32
    %c0_i32_0 = arith.constant 0 : i32
    %c0_i32_1 = arith.constant 0 : i32
    return %c0_i32, %c0_i32_0 : i32, i32
  }
  func.func @transform_3(%arg0: i32) -> (i32, i32) {
    %c0_i32 = arith.constant 0 : i32
    %c0_i32_0 = arith.constant 0 : i32
    %c0_i32_1 = arith.constant 0 : i32
    return %c0_i32, %c0_i32_0 : i32, i32
  }
  func.func @transform_4(%arg0: i32) -> (i32, i32) {
    %c0_i32 = arith.constant 0 : i32
    %c0_i32_0 = arith.constant 0 : i32
    %c0_i32_1 = arith.constant 0 : i32
    return %c0_i32, %c0_i32_0 : i32, i32
  }
  func.func @transform_5(%arg0: i32) -> (i32, i32) {
    %c0_i32 = arith.constant 0 : i32
    %c0_i32_0 = arith.constant 0 : i32
    return %arg0, %c0_i32 : i32, i32
  }
}

</mosaic_0001>

<llo_original>
// kernel: tpu_custom_call.1
$region0: #{tpu_custom_call.1}
  #allocation0 [shape = 'u32[]', space=smem, size = 0x4, offset = 0x4, fixed_abs, tag = 'smem constant byte address 0x4 - core index']
  #allocation1 [shape = 'u32[144,128]{1,0:T(1,128)}', space=vmem, size = 0x12000, scoped, tag = 'internal scratch']
  %s0 = inlined_call_operand.vmem [shape: bf16[64,25], index: 0, kind: input, shape index: {}]
  %s1 = inlined_call_operand.vmem [shape: bf16[25,128], index: 1, kind: input, shape index: {}]
  %s2 = inlined_call_operand.vmem [shape: f32[1,128], index: 2, kind: input, shape index: {}]
  %s3 = inlined_call_operand.hbm [shape: bf16[128,256], index: 3, kind: input, shape index: {}]
  %s4 = inlined_call_operand.vmem [shape: f32[1,256], index: 4, kind: input, shape index: {}]
  %s5 = inlined_call_operand.hbm [shape: f32[64,256], index: 5, kind: output, shape index: {}]
  %s6 = sld [smem:[#allocation0]]
  $region34: #{tpu_custom_call.1} parent=0
    _
  %s8 = ssub.s32 1, %s6
  %s9 = scalar_select 0, %s8, %s6
  $region1: #{tpu_custom_call.1} parent=0
    #allocation2 [shape = 'u8[65536]{0}', space=vmem, size = 0x10000, scoped, tag = 'input window, operand 3, single buffered']
    #allocation3 [shape = 's32[1]{0}', space=sflag, size = 0x4, scoped, tag = 'scoped memory for tpu_custom_call.1']
    #allocation4 [shape = 's32[1]{0}', space=sflag, size = 0x4, scoped, tag = 'scoped memory for tpu_custom_call.1']
    #allocation5 [shape = 'u8[65536]{0}', space=vmem, size = 0x10000, scoped, tag = 'output window, operand 0, single buffered']
    %10 = vsyncpa [#allocation3], 0
    %11 = vsyncpa [#allocation4], 0
    // Predicated region
    $region2: #{tpu_custom_call.1} parent=1 // pred_check
      _
    $region3: #{tpu_custom_call.1} parent=1 // pred_check_branch
      %13 = sbr.rel (0) target = $region5
    $region4: #{tpu_custom_call.1} parent=1 // pred_region
      _
    $region5: #{tpu_custom_call.1} parent=1 // pred_fallthru
      _
    // Predicated region
    $region6: #{tpu_custom_call.1} parent=1 // pred_check
      _
    $region7: #{tpu_custom_call.1} parent=1 // pred_check_branch
      %15 = sbr.rel (0) target = $region9
    $region8: #{tpu_custom_call.1} parent=1 // pred_region
      _
    $region9: #{tpu_custom_call.1} parent=1 // pred_fallthru
      _
    // Predicated region
    $region10: #{tpu_custom_call.1} parent=1 // pred_check
      _
    $region11: #{tpu_custom_call.1} parent=1 // pred_check_branch
      %17 = sbr.rel (0) target = $region13
    $region12: #{tpu_custom_call.1} parent=1 // pred_region
      _
    $region13: #{tpu_custom_call.1} parent=1 // pred_fallthru
      _
    // Predicated region
    $region14: #{tpu_custom_call.1} parent=1 // pred_check
      _
    $region15: #{tpu_custom_call.1} parent=1 // pred_check_branch
      %19 = sbr.rel (0) target = $region17
    $region16: #{tpu_custom_call.1} parent=1 // pred_region
      %s21 = ssub.s32 2048, 2048
      %22 = vsyncadd [#allocation3], %s21
      %s23 = sshll.u32 [#allocation2], 4
      %s24 = int_to_ptr.vmem [resolvable:$true] %s23
      %29 = dma.hbm_to_vmem [thread:$0]  %s3, 2048, %s24, [#allocation3], 128, 128, 8
    $region17: #{tpu_custom_call.1} parent=1 // pred_fallthru
      _
    // Predicated region
    $region18: #{tpu_custom_call.1} parent=1 // pred_check
      _
    $region19: #{tpu_custom_call.1} parent=1 // pred_check_branch
      %31 = sbr.rel (0) target = $region21
    $region20: #{tpu_custom_call.1} parent=1 // pred_region
      _
    $region21: #{tpu_custom_call.1} parent=1 // pred_fallthru
      _
    // Predicated region
    $region22: #{tpu_custom_call.1} parent=1 // pred_check
      _
    $region23: #{tpu_custom_call.1} parent=1 // pred_check_branch
      %33 = sbr.rel (0) target = $region25
    $region24: #{tpu_custom_call.1} parent=1 // pred_region
      %34 = dma.done [#allocation3], 2048
    $region25: #{tpu_custom_call.1} parent=1 // pred_fallthru
      _
    %v36 = vld [vmem:[%s0] sm:$0xf]
    %v37 = vld [vmem:[%s0 + $0x4] sm:$0xf]
    %v38 = vld [vmem:[%s0 + $0x8] sm:$0xf]
    %v39 = vld [vmem:[%s0 + $0xc] sm:$0xf]
    %v40 = vld [vmem:[%s0 + $0x10] sm:$0xf]
    %v41 = vld [vmem:[%s0 + $0x14] sm:$0xf]
    %v42 = vld [vmem:[%s0 + $0x18] sm:$0xf]
    %v43 = vld [vmem:[%s0 + $0x1c] sm:$0xf]
    %v44 = vld [vmem:[%s1] sm:$0xf]
    %v45 = vld [vmem:[%s1 + $0x4] sm:$0xf]
    %v46 = vld [vmem:[%s1 + $0x8] sm:$0xf]
    %v47 = vld [vmem:[%s1 + $0xc] sm:$0x1]
    %v48 = vld [vmem:[%s2] sm:$0x1]
    %v50 = vlaneseq
    %v51 = vshrl.u32 %v50, 7
    %v52 = vsub.s32 0, %v51
    %v53 = vrot.slane %v48, %v52
    %v63 = vunpack.c.l.b16 %v36
    %v64 = vunpack.c.l.b16 %v37
    %v65 = vunpack.c.l.b16 %v38
    %v66 = vunpack.c.l.b16 %v39
    %v67 = vunpack.c.l.b16 %v40
    %v68 = vunpack.c.l.b16 %v41
    %v69 = vunpack.c.l.b16 %v42
    %v70 = vunpack.c.l.b16 %v43
    %v71 = vpack.c.b16 %v64, %v63
    %v72 = vpack.c.b16 %v66, %v65
    %v73 = vpack.c.b16 %v68, %v67
    %v74 = vpack.c.b16 %v70, %v69
    %v79 = vunpack.c.l.b16 %v44
    %v80 = vunpack.c.l.b16 %v45
    %v81 = vunpack.c.l.b16 %v46
    %v82 = vunpack.c.l.b16 %v47
    %v83 = vpack.c.b16 %v80, %v79
    %v84 = vpack.c.b16 %v82, %v81
    %vm86 = vcmask 203776
    %v88 = vsel %vm86, %v71, 0
    %v91 = vsel %vm86, %v72, 0
    %v94 = vsel %vm86, %v73, 0
    %v97 = vsel %vm86, %v74, 0
    %vm99 = vcmask 1043456
    %vm100 = vcmask 1044480
    %v101 = vsel %vm99, 4294967295, 65535
    %v102 = vsel %vm100, %v101, 0
    %v104 = vand.u32 %v84, %v102
    %106 = vmatprep.subr.bf16.mxu0 0
    %107 = vmatpush1.bf16.msra.mxu0 %v83
    %108 = vmatprep.subr.bf16.mxu0 0
    %109 = vmatpush1.bf16.msra.mxu0 %v104
    %110 = vmatprep.subr.bf16.mxu0 0
    %111 = vmatpush1.bf16.msra.mxu0 0
    %112 = vmatprep.subr.bf16.mxu0 0
    %113 = vmatpush1.bf16.msra.mxu0 0
    %114 = vmatprep.subr.bf16.mxu0 0
    %115 = vmatpush1.bf16.msra.mxu0 0
    %116 = vmatprep.subr.bf16.mxu0 0
    %117 = vmatpush1.bf16.msra.mxu0 0
    %118 = vmatprep.subr.bf16.mxu0 0
    %119 = vmatpush1.bf16.msra.mxu0 0
    %120 = vmatprep.subr.bf16.mxu0 0
    %121 = vmatpush1.bf16.msra.mxu0 0
    %122 = vmatprep.subr.bf16.mxu0 0
    %123 = vmatpush1.bf16.msra.mxu0 0
    %124 = vmatprep.subr.bf16.mxu0 0
    %125 = vmatpush1.bf16.msra.mxu0 0
    %126 = vmatprep.subr.bf16.mxu0 0
    %127 = vmatpush1.bf16.msra.mxu0 0
    %128 = vmatprep.subr.bf16.mxu0 0
    %129 = vmatpush1.bf16.msra.mxu0 0
    %130 = vmatprep.subr.bf16.mxu0 0
    %131 = vmatpush1.bf16.msra.mxu0 0
    %132 = vmatprep.subr.bf16.mxu0 0
    %133 = vmatpush1.bf16.msra.mxu0 0
    %134 = vmatprep.subr.bf16.mxu0 0
    %135 = vmatpush1.bf16.msra.mxu0 0
    %136 = vmatprep.subr.bf16.mxu0 0
    %137 = vmatpush1.bf16.msra.mxu0 0
    %138 = vmatprep.mubr.bf16.mxu0 0
    %139 = vmatmul.mubr.bf16.gmra.mrb[0].mxu0 %v88
    %v140 = vpop.f32.mrb[0].mxu0
    %v141 = vadd.f32 %v53, %v140
    %v142 = vpop.f32.mrb[0].mxu0
    %v143 = vpop.f32.mrb[0].mxu0
    %v144 = vadd.f32 %v53, %v143
    %v145 = vpop.f32.mrb[0].mxu0
    %146 = vmatprep.mubr.bf16.mxu0 0
    %147 = vmatmul.mubr.bf16.gmra.mrb[0].mxu0 %v91
    %v148 = vpop.f32.mrb[0].mxu0
    %v149 = vadd.f32 %v53, %v148
    %v150 = vpop.f32.mrb[0].mxu0
    %v151 = vpop.f32.mrb[0].mxu0
    %v152 = vadd.f32 %v53, %v151
    %v153 = vpop.f32.mrb[0].mxu0
    %154 = vmatprep.mubr.bf16.mxu0 0
    %155 = vmatmul.mubr.bf16.gmra.mrb[0].mxu0 %v94
    %v156 = vpop.f32.mrb[0].mxu0
    %v157 = vadd.f32 %v53, %v156
    %v158 = vpop.f32.mrb[0].mxu0
    %v159 = vpop.f32.mrb[0].mxu0
    %v160 = vadd.f32 %v53, %v159
    %v161 = vpop.f32.mrb[0].mxu0
    %162 = vmatprep.mubr.bf16.mxu0 0
    %163 = vmatmul.mubr.bf16.gmra.mrb[0].mxu0 %v97
    %v164 = vpop.f32.mrb[0].mxu0
    %v165 = vadd.f32 %v53, %v164
    %v166 = vpop.f32.mrb[0].mxu0
    %v167 = vpop.f32.mrb[0].mxu0
    %v168 = vadd.f32 %v53, %v167
    %v169 = vpop.f32.mrb[0].mxu0
    %170 = vdwg.mxu0
    %v171 = vmax.f32 %v141, 0.0
    %v172 = vmax.f32 %v144, 0.0
    %v173 = vmax.f32 %v149, 0.0
    %v174 = vmax.f32 %v152, 0.0
    %v175 = vmax.f32 %v157, 0.0
    %v176 = vmax.f32 %v160, 0.0
    %v177 = vmax.f32 %v165, 0.0
    %v178 = vmax.f32 %v168, 0.0
    %v179 = vpack.c.bf16 %v172, %v171
    %v180 = vpack.c.bf16 %v174, %v173
    %v181 = vpack.c.bf16 %v176, %v175
    %v182 = vpack.c.bf16 %v178, %v177
    %v183 = vld [vmem:[#allocation2] sm:$0xff]
    %v184 = vld [vmem:[#allocation2 + $0x8] sm:$0xff]
    %v185 = vld [vmem:[#allocation2 + $0x10] sm:$0xff]
    %v186 = vld [vmem:[#allocation2 + $0x18] sm:$0xff]
    %v187 = vld [vmem:[#allocation2 + $0x20] sm:$0xff]
    %v188 = vld [vmem:[#allocation2 + $0x28] sm:$0xff]
    %v189 = vld [vmem:[#allocation2 + $0x30] sm:$0xff]
    %v190 = vld [vmem:[#allocation2 + $0x38] sm:$0xff]
    %v191 = vld [vmem:[#allocation2 + $0x40] sm:$0xff]
    %v192 = vld [vmem:[#allocation2 + $0x48] sm:$0xff]
    %v193 = vld [vmem:[#allocation2 + $0x50] sm:$0xff]
    %v194 = vld [vmem:[#allocation2 + $0x58] sm:$0xff]
    %v195 = vld [vmem:[#allocation2 + $0x60] sm:$0xff]
    %v196 = vld [vmem:[#allocation2 + $0x68] sm:$0xff]
    %v197 = vld [vmem:[#allocation2 + $0x70] sm:$0xff]
    %v198 = vld [vmem:[#allocation2 + $0x78] sm:$0xff]
    %v199 = vld [vmem:[%s4] sm:$0x3]
    %v201 = vlaneseq
    %v202 = vshrl.u32 %v201, 7
    %v203 = vsub.s32 0, %v202
    %v204 = vrot.slane %v199, %v203
    %v205 = vlaneseq
    %v206 = vshrl.u32 %v205, 7
    %v207 = vsub.s32 1, %v206
    %v208 = vrot.slane %v199, %v207
    %v227 = vunpack.c.l.b16 %v183
    %v228 = vunpack.c.h.b16 %v183
    %v229 = vunpack.c.l.b16 %v184
    %v230 = vunpack.c.h.b16 %v184
    %v231 = vunpack.c.l.b16 %v185
    %v232 = vunpack.c.h.b16 %v185
    %v233 = vunpack.c.l.b16 %v186
    %v234 = vunpack.c.h.b16 %v186
    %v235 = vunpack.c.l.b16 %v187
    %v236 = vunpack.c.h.b16 %v187
    %v237 = vunpack.c.l.b16 %v188
    %v238 = vunpack.c.h.b16 %v188
    %v239 = vunpack.c.l.b16 %v189
    %v240 = vunpack.c.h.b16 %v189
    %v241 = vunpack.c.l.b16 %v190
    %v242 = vunpack.c.h.b16 %v190
    %v243 = vunpack.c.l.b16 %v191
    %v244 = vunpack.c.h.b16 %v191
    %v245 = vunpack.c.l.b16 %v192
    %v246 = vunpack.c.h.b16 %v192
    %v247 = vunpack.c.l.b16 %v193
    %v248 = vunpack.c.h.b16 %v193
    %v249 = vunpack.c.l.b16 %v194
    %v250 = vunpack.c.h.b16 %v194
    %v251 = vunpack.c.l.b16 %v195
    %v252 = vunpack.c.h.b16 %v195
    %v253 = vunpack.c.l.b16 %v196
    %v254 = vunpack.c.h.b16 %v196
    %v255 = vunpack.c.l.b16 %v197
    %v256 = vunpack.c.h.b16 %v197
    %v257 = vunpack.c.l.b16 %v198
    %v258 = vunpack.c.h.b16 %v198
    %v259 = vpack.c.b16 %v229, %v227
    %v260 = vpack.c.b16 %v230, %v228
    %v261 = vpack.c.b16 %v233, %v231
    %v262 = vpack.c.b16 %v234, %v232
    %v263 = vpack.c.b16 %v237, %v235
    %v264 = vpack.c.b16 %v238, %v236
    %v265 = vpack.c.b16 %v241, %v239
    %v266 = vpack.c.b16 %v242, %v240
    %v267 = vpack.c.b16 %v245, %v243
    %v268 = vpack.c.b16 %v246, %v244
    %v269 = vpack.c.b16 %v249, %v247
    %v270 = vpack.c.b16 %v250, %v248
    %v271 = vpack.c.b16 %v253, %v251
    %v272 = vpack.c.b16 %v254, %v252
    %v273 = vpack.c.b16 %v257, %v255
    %v274 = vpack.c.b16 %v258, %v256
    %291 = vmatprep.subr.bf16.mxu0 %v260
    %292 = vmatpush1.bf16.msra.mxu0 %v259
    %293 = vmatprep.subr.bf16.mxu0 %v262
    %294 = vmatpush1.bf16.msra.mxu0 %v261
    %295 = vmatprep.subr.bf16.mxu0 %v264
    %296 = vmatpush1.bf16.msra.mxu0 %v263
    %297 = vmatprep.subr.bf16.mxu0 %v266
    %298 = vmatpush1.bf16.msra.mxu0 %v265
    %299 = vmatprep.subr.bf16.mxu0 %v268
    %300 = vmatpush1.bf16.msra.mxu0 %v267
    %301 = vmatprep.subr.bf16.mxu0 %v270
    %302 = vmatpush1.bf16.msra.mxu0 %v269
    %303 = vmatprep.subr.bf16.mxu0 %v272
    %304 = vmatpush1.bf16.msra.mxu0 %v271
    %305 = vmatprep.subr.bf16.mxu0 %v274
    %306 = vmatpush1.bf16.msra.mxu0 %v273
    %307 = vmatprep.subr.bf16.mxu0 0
    %308 = vmatpush1.bf16.msra.mxu0 0
    %309 = vmatprep.subr.bf16.mxu0 0
    %310 = vmatpush1.bf16.msra.mxu0 0
    %311 = vmatprep.subr.bf16.mxu0 0
    %312 = vmatpush1.bf16.msra.mxu0 0
    %313 = vmatprep.subr.bf16.mxu0 0
    %314 = vmatpush1.bf16.msra.mxu0 0
    %315 = vmatprep.subr.bf16.mxu0 0
    %316 = vmatpush1.bf16.msra.mxu0 0
    %317 = vmatprep.subr.bf16.mxu0 0
    %318 = vmatpush1.bf16.msra.mxu0 0
    %319 = vmatprep.subr.bf16.mxu0 0
    %320 = vmatpush1.bf16.msra.mxu0 0
    %321 = vmatprep.subr.bf16.mxu0 0
    %322 = vmatpush1.bf16.msra.mxu0 0
    %323 = vmatprep.mubr.bf16.mxu0 0
    %324 = vmatmul.mubr.bf16.gmra.mrb[0].mxu0 %v179
    %v325 = vpop.f32.mrb[0].mxu0
    %v326 = vadd.f32 %v204, %v325
    %v327 = vpop.f32.mrb[0].mxu0
    %v328 = vadd.f32 %v208, %v327
    %v329 = vpop.f32.mrb[0].mxu0
    %v330 = vadd.f32 %v204, %v329
    %v331 = vpop.f32.mrb[0].mxu0
    %v332 = vadd.f32 %v208, %v331
    %333 = vmatprep.mubr.bf16.mxu0 0
    %334 = vmatmul.mubr.bf16.gmra.mrb[0].mxu0 %v180
    %v335 = vpop.f32.mrb[0].mxu0
    %v336 = vadd.f32 %v204, %v335
    %v337 = vpop.f32.mrb[0].mxu0
    %v338 = vadd.f32 %v208, %v337
    %v339 = vpop.f32.mrb[0].mxu0
    %v340 = vadd.f32 %v204, %v339
    %v341 = vpop.f32.mrb[0].mxu0
    %v342 = vadd.f32 %v208, %v341
    %343 = vmatprep.mubr.bf16.mxu0 0
    %344 = vmatmul.mubr.bf16.gmra.mrb[0].mxu0 %v181
    %v345 = vpop.f32.mrb[0].mxu0
    %v346 = vadd.f32 %v204, %v345
    %v347 = vpop.f32.mrb[0].mxu0
    %v348 = vadd.f32 %v208, %v347
    %v349 = vpop.f32.mrb[0].mxu0
    %v350 = vadd.f32 %v204, %v349
    %v351 = vpop.f32.mrb[0].mxu0
    %v352 = vadd.f32 %v208, %v351
    %353 = vmatprep.mubr.bf16.mxu0 0
    %354 = vmatmul.mubr.bf16.gmra.mrb[0].mxu0 %v182
    %v355 = vpop.f32.mrb[0].mxu0
    %v356 = vadd.f32 %v204, %v355
    %v357 = vpop.f32.mrb[0].mxu0
    %v358 = vadd.f32 %v208, %v357
    %v359 = vpop.f32.mrb[0].mxu0
    %v360 = vadd.f32 %v204, %v359
    %v361 = vpop.f32.mrb[0].mxu0
    %v362 = vadd.f32 %v208, %v361
    %363 = vdwg.mxu0
    %364 = vst [vmem:[#allocation5] sm:$0xff] %v326
    %365 = vst [vmem:[#allocation5 + $0x8] sm:$0xff] %v328
    %366 = vst [vmem:[#allocation5 + $0x10] sm:$0xff] %v330
    %367 = vst [vmem:[#allocation5 + $0x18] sm:$0xff] %v332
    %368 = vst [vmem:[#allocation5 + $0x20] sm:$0xff] %v336
    %369 = vst [vmem:[#allocation5 + $0x28] sm:$0xff] %v338
    %370 = vst [vmem:[#allocation5 + $0x30] sm:$0xff] %v340
    %371 = vst [vmem:[#allocation5 + $0x38] sm:$0xff] %v342
    %372 = vst [vmem:[#allocation5 + $0x40] sm:$0xff] %v346
    %373 = vst [vmem:[#allocation5 + $0x48] sm:$0xff] %v348
    %374 = vst [vmem:[#allocation5 + $0x50] sm:$0xff] %v350
    %375 = vst [vmem:[#allocation5 + $0x58] sm:$0xff] %v352
    %376 = vst [vmem:[#allocation5 + $0x60] sm:$0xff] %v356
    %377 = vst [vmem:[#allocation5 + $0x68] sm:$0xff] %v358
    %378 = vst [vmem:[#allocation5 + $0x70] sm:$0xff] %v360
    %379 = vst [vmem:[#allocation5 + $0x78] sm:$0xff] %v362
    // Predicated region
    $region26: #{tpu_custom_call.1} parent=1 // pred_check
      _
    $region27: #{tpu_custom_call.1} parent=1 // pred_check_branch
      %381 = sbr.rel (0) target = $region29
    $region28: #{tpu_custom_call.1} parent=1 // pred_region
      %s383 = ssub.s32 2048, 2048
      %384 = vsyncadd [#allocation4], %s383
      %s385 = sshll.u32 [#allocation5], 4
      %s386 = int_to_ptr.vmem [resolvable:$true] %s385
      %391 = dma.vmem_to_hbm [thread:$0]  %s386, 2048, %s5, [#allocation4], 256, 256, 16
    $region29: #{tpu_custom_call.1} parent=1 // pred_fallthru
      _
    // Predicated region
    $region30: #{tpu_custom_call.1} parent=1 // pred_check
      _
    $region31: #{tpu_custom_call.1} parent=1 // pred_check_branch
      %393 = sbr.rel (0) target = $region33
    $region32: #{tpu_custom_call.1} parent=1 // pred_region
      %394 = dma.done [#allocation4], 2048
    $region33: #{tpu_custom_call.1} parent=1 // pred_fallthru
      _
    %395 = vsyncpa [#allocation3], 1
    %396 = vsyncpa [#allocation4], 1

</llo_original>
